<compile_context>
chip_gen: v7x
topology: tpu7x:2x2x1
jax: 0.10.0
libtpu: 0.0.40
codegen_flags: <defaults>
</compile_context>

<pallas_src>
import functools

import jax
import jax.numpy as jnp
from jax.experimental import pallas as pl
from jax.experimental.pallas import tpu as pltpu

_LANE = 128
_SUBLANE = 8


def _ws_bytes_per_elem(in_itemsize):
    # 2x double-buffered input block + ~3 live full-size temporaries
    # (cast-to-f32 / exp result / select result), counted as f32.
    return 2 * in_itemsize + 3 * 4


def _vmem_limit_bytes():
    """Generation-aware scoped-VMEM limit (~48 MiB on v7x, ~96 MiB on v5e/v6e)."""
    cap = 64 * 1024 * 1024
    try:
        cap = int(getattr(pltpu.get_tpu_info(), "vmem_capacity_bytes", cap))
    except Exception:
        pass
    return max(32 * 1024 * 1024, min(cap * 3 // 4, 96 * 1024 * 1024))


def _choose_tiles(C, T, in_itemsize, ws_budget_bytes):
    """Pick (tile_c, tile_t) so the per-step working set fits ws_budget_bytes."""
    per_elem = _ws_bytes_per_elem(in_itemsize)

    # Time tile: full T when it is small / not lane-aligned, otherwise a
    # multiple of 128 (the grid uses cdiv, so tile_t need not divide T; padded
    # tail columns are dropped on writeback).
    if T < _LANE:
        tile_t_cap = T
    else:
        tile_t_cap = min((T // _LANE) * _LANE, 8192)

    # Prefer keeping the whole class axis resident (single reduction chunk).
    cols_full_c = ws_budget_bytes // max(1, C * per_elem)
    if cols_full_c >= tile_t_cap:
        return C, tile_t_cap
    if T >= _LANE and cols_full_c >= _LANE:
        return C, min((int(cols_full_c) // _LANE) * _LANE, tile_t_cap)

    # Class axis too large for the budget: chunk it (multiples of 8 sublanes,
    # ragged tail masked in-kernel) and keep a moderate time tile.
    tile_t = tile_t_cap if T < _LANE else min(tile_t_cap, 512)
    tile_c = ws_budget_bytes // max(1, tile_t * per_elem)
    tile_c = max(_SUBLANE, min(C, (int(tile_c) // _SUBLANE) * _SUBLANE))
    return int(tile_c), int(tile_t)


def _ce_loss_kernel(logits_ref, tgt_ref, loss_ref, m_ref, l_ref, p_ref, *,
                    num_classes):
    """One (batch, time-tile, class-chunk) grid step of row-wise CE loss.

    logits_ref: (1, tile_c, tile_t) logits chunk (native dtype, classes on sublanes)
    tgt_ref:    (1, 1, tile_t) int32 target class indices
    loss_ref:   (1, 1, tile_t) f32 per-row loss (written on the last class chunk)
    m_ref / l_ref / p_ref: (1, tile_t) f32 running max / sum-exp / picked logit
    """
    c = pl.program_id(2)
    n_c = pl.num_programs(2)
    tile_c = logits_ref.shape[1]

    @pl.when(c == 0)
    def _():
        m_ref[...] = jnp.full(m_ref.shape, -jnp.inf, dtype=m_ref.dtype)
        l_ref[...] = jnp.zeros(l_ref.shape, dtype=l_ref.dtype)
        p_ref[...] = jnp.zeros(p_ref.shape, dtype=p_ref.dtype)

    x = logits_ref[0]                      # (tile_c, tile_t), native dtype
    tgt = tgt_ref[0]                       # (1, tile_t) int32

    # Global class ids for this chunk: (tile_c, 1), broadcasts over lanes.
    cls = jax.lax.broadcasted_iota(jnp.int32, (tile_c, 1), 0) + c * tile_c
    ragged = (num_classes % tile_c) != 0   # static: mask only if a chunk overhangs

    # Running max over classes (kept in the input dtype: exact).
    if ragged:
        neg_inf = jnp.array(-jnp.inf, dtype=x.dtype)
        chunk_max = jnp.max(jnp.where(cls < num_classes, x, neg_inf),
                            axis=0, keepdims=True)
    else:
        chunk_max = jnp.max(x, axis=0, keepdims=True)
    m_prev = m_ref[...]
    m_new = jnp.maximum(m_prev, chunk_max.astype(jnp.float32))

    # Sum of exp over this chunk (upcast to f32 only on the exp path; every
    # full-size intermediate has a single consumer).
    e = jnp.exp(x.astype(jnp.float32) - m_new)
    if ragged:
        e = jnp.where(cls < num_classes, e, 0.0)
    sum_e = jnp.sum(e, axis=0, keepdims=True)
    l_new = l_ref[...] * jnp.exp(m_prev - m_new) + sum_e

    # Target logit pick via iota mask (exact in the input dtype: at most one
    # class matches per column; padded / out-of-chunk rows never match).
    picked = jnp.sum(jnp.where(cls == tgt, x, 0), axis=0, keepdims=True)
    p_new = p_ref[...] + picked.astype(jnp.float32)

    m_ref[...] = m_new
    l_ref[...] = l_new
    p_ref[...] = p_new

    @pl.when(c == n_c - 1)
    def _():
        # loss = logsumexp - x[tgt] = (m + log(l)) - p
        loss_ref[0] = m_new + jnp.log(l_new) - p_new


def ce_loss(logits_nct, target_indices, *, tile_t=None, tile_c=None,
            vmem_limit_bytes=None):
    """logits_nct: (B, C, T) float; target_indices: (B, T) int -> {'loss/ce': scalar}."""
    B, C, T = logits_nct.shape
    itemsize = jnp.dtype(logits_nct.dtype).itemsize

    if vmem_limit_bytes is None:
        vmem_limit_bytes = _vmem_limit_bytes()
    auto_c, auto_t = _choose_tiles(C, T, itemsize, int(vmem_limit_bytes) * 4 // 5)
    if tile_c is None:
        tile_c = auto_c
    if tile_t is None:
        tile_t = auto_t
    n_t = -(-T // tile_t)
    n_c = -(-C // tile_c)

    # (B, T) -> (B, 1, T): free reshape, gives lane-dense (1, 1, tile_t) blocks.
    targets = target_indices.astype(jnp.int32).reshape(B, 1, T)

    n_rows = B * T
    cost = pl.CostEstimate(
        flops=6 * n_rows * C,
        transcendentals=n_rows * C + 2 * n_rows,
        bytes_accessed=logits_nct.size * itemsize + n_rows * 4 + n_rows * 4,
    )

    kernel = functools.partial(_ce_loss_kernel, num_classes=C)
    row_losses = pl.pallas_call(
        kernel,
        out_shape=jax.ShapeDtypeStruct((B, 1, T), jnp.float32),
        grid=(B, n_t, n_c),
        in_specs=[
            pl.BlockSpec((1, tile_c, tile_t), lambda b, t, c: (b, c, t)),
            pl.BlockSpec((1, 1, tile_t), lambda b, t, c: (b, 0, t)),
        ],
        out_specs=pl.BlockSpec((1, 1, tile_t), lambda b, t, c: (b, 0, t)),
        scratch_shapes=[
            pltpu.VMEM((1, tile_t), jnp.float32),   # running max
            pltpu.VMEM((1, tile_t), jnp.float32),   # running sum-exp
            pltpu.VMEM((1, tile_t), jnp.float32),   # picked target logit
        ],
        compiler_params=pltpu.CompilerParams(
            dimension_semantics=("parallel", "parallel", "arbitrary"),
            vmem_limit_bytes=int(vmem_limit_bytes),
        ),
        cost_estimate=cost,
    )(logits_nct, targets)

    # mean reduction over all B*T rows (nn.CrossEntropyLoss default)
    loss = jnp.sum(row_losses) / jnp.float32(n_rows)
    return {"loss/ce": loss}


if __name__ == "__main__":
    key = jax.random.PRNGKey(0)
    k_logits, k_tgt = jax.random.split(key)

    B, C, T = 2, 32, 8          # (batch, num_classes, sequence)
    logits = jax.random.normal(k_logits, (B, C, T), dtype=jnp.float32)
    targets = jax.random.randint(k_tgt, (B, T), 0, C, dtype=jnp.int32)

    # plain-JAX reference
    lf = jnp.transpose(logits, (0, 2, 1)).reshape(B * T, C)
    tf = targets.reshape(B * T)
    ref = jnp.mean(jax.nn.logsumexp(lf, axis=-1) - lf[jnp.arange(B * T), tf])

    # default path (single class chunk)
    loss = jax.block_until_ready(ce_loss(logits, targets)["loss/ce"])
    assert jnp.allclose(loss, ref, atol=1e-5, rtol=1e-5), (loss, ref)

    # forced class chunking: exercises the online max/sum-exp carry across the
    # innermost "arbitrary" grid axis
    loss_chunked = jax.block_until_ready(
        ce_loss(logits, targets, tile_c=8)["loss/ce"])
    assert jnp.allclose(loss_chunked, ref, atol=1e-5, rtol=1e-5), (loss_chunked, ref)

    print("KERNEL_OK")
</pallas_src>

<mosaic_0001>
module attributes {stable_mosaic.version = 11 : i64} {
  func.func @_ce_loss_kernel(%arg0: i32, %arg1: i32, %arg2: i32, %arg3: memref<1x32x8xf32, #tpu.memory_space<vmem>>, %arg4: memref<1x1x8xi32, #tpu.memory_space<vmem>>, %arg5: memref<1x1x8xf32, #tpu.memory_space<vmem>>, %arg6: memref<1x8xf32, #tpu.memory_space<vmem>>, %arg7: memref<1x8xf32, #tpu.memory_space<vmem>>, %arg8: memref<1x8xf32, #tpu.memory_space<vmem>>) attributes {dimension_semantics = [#tpu.dimension_semantics<parallel>, #tpu.dimension_semantics<parallel>, #tpu.dimension_semantics<arbitrary>], iteration_bounds = array<i64: 2, 1, 1>, scalar_prefetch = 0 : i64, scratch_operands = 3 : i64, tpu.core_type = #tpu.core_type<tc>, window_params = [{transform_indices = @transform_0, window_bounds = array<i64: 1, 32, 8>}, {transform_indices = @transform_1, window_bounds = array<i64: 1, 1, 8>}, {transform_indices = @transform_2, window_bounds = array<i64: 1, 1, 8>}]} {
    %c0_i32 = arith.constant 0 : i32
    %0 = arith.cmpi eq, %arg2, %c0_i32 : i32
    %1 = arith.extui %0 : i1 to i32
    %c0_i32_0 = arith.constant 0 : i32
    %2 = arith.cmpi ne, %1, %c0_i32_0 : i32
    scf.if %2 {
      %cst_23 = arith.constant 0xFF800000 : f32
      %41 = vector.broadcast %cst_23 : f32 to vector<1x8xf32>
      %c0_24 = arith.constant 0 : index
      %c0_25 = arith.constant 0 : index
      %42 = vector.load %arg6[%c0_24, %c0_25] : memref<1x8xf32, #tpu.memory_space<vmem>>, vector<1x8xf32>
      tpu.vector_store %arg6[%c0_24, %c0_25], %41 {strides = array<i32>} : memref<1x8xf32, #tpu.memory_space<vmem>>, vector<1x8xf32>,
      %cst_26 = arith.constant 0.000000e+00 : f32
      %43 = vector.broadcast %cst_26 : f32 to vector<1x8xf32>
      %c0_27 = arith.constant 0 : index
      %c0_28 = arith.constant 0 : index
      %44 = vector.load %arg7[%c0_27, %c0_28] : memref<1x8xf32, #tpu.memory_space<vmem>>, vector<1x8xf32>
      tpu.vector_store %arg7[%c0_27, %c0_28], %43 {strides = array<i32>} : memref<1x8xf32, #tpu.memory_space<vmem>>, vector<1x8xf32>,
      %cst_29 = arith.constant 0.000000e+00 : f32
      %45 = vector.broadcast %cst_29 : f32 to vector<1x8xf32>
      %c0_30 = arith.constant 0 : index
      %c0_31 = arith.constant 0 : index
      %46 = vector.load %arg8[%c0_30, %c0_31] : memref<1x8xf32, #tpu.memory_space<vmem>>, vector<1x8xf32>
      tpu.vector_store %arg8[%c0_30, %c0_31], %45 {strides = array<i32>} : memref<1x8xf32, #tpu.memory_space<vmem>>, vector<1x8xf32>,
    } else {
    }
    %c0 = arith.constant 0 : index
    %c0_1 = arith.constant 0 : index
    %c0_2 = arith.constant 0 : index
    %3 = vector.load %arg3[%c0, %c0_1, %c0_2] : memref<1x32x8xf32, #tpu.memory_space<vmem>>, vector<1x32x8xf32>
    %4 = vector.shape_cast %3 : vector<1x32x8xf32> to vector<32x8xf32>
    %c0_3 = arith.constant 0 : index
    %c0_4 = arith.constant 0 : index
    %c0_5 = arith.constant 0 : index
    %5 = vector.load %arg4[%c0_3, %c0_4, %c0_5] : memref<1x1x8xi32, #tpu.memory_space<vmem>>, vector<1x1x8xi32>
    %6 = vector.shape_cast %5 : vector<1x1x8xi32> to vector<1x8xi32>
    %7 = tpu.iota {dimensions = array<i32: 0>} : vector<32x1xi32>
    %c32_i32 = arith.constant 32 : i32
    %8 = arith.muli %arg2, %c32_i32 : i32
    %9 = vector.broadcast %8 : i32 to vector<32x1xi32>
    %10 = arith.addi %7, %9 : vector<32x1xi32>
    %cst = arith.constant dense<0xFF800000> : vector<8xf32>
    %11 = vector.multi_reduction <maximumf>, %4, %cst [0] : vector<32x8xf32> to vector<8xf32>
    %12 = vector.shape_cast %11 : vector<8xf32> to vector<1x8xf32>
    %c0_6 = arith.constant 0 : index
    %c0_7 = arith.constant 0 : index
    %13 = vector.load %arg6[%c0_6, %c0_7] : memref<1x8xf32, #tpu.memory_space<vmem>>, vector<1x8xf32>
    %14 = arith.maximumf %13, %12 : vector<1x8xf32>
    %15 = vector.broadcast %14 : vector<1x8xf32> to vector<32x8xf32>
    %16 = arith.subf %4, %15 : vector<32x8xf32>
    %17 = math.exp %16 : vector<32x8xf32>
    %cst_8 = arith.constant dense<0.000000e+00> : vector<8xf32>
    %18 = vector.multi_reduction <add>, %17, %cst_8 [0] : vector<32x8xf32> to vector<8xf32>
    %19 = vector.shape_cast %18 : vector<8xf32> to vector<1x8xf32>
    %c0_9 = arith.constant 0 : index
    %c0_10 = arith.constant 0 : index
    %20 = vector.load %arg7[%c0_9, %c0_10] : memref<1x8xf32, #tpu.memory_space<vmem>>, vector<1x8xf32>
    %21 = arith.subf %13, %14 : vector<1x8xf32>
    %22 = math.exp %21 : vector<1x8xf32>
    %23 = arith.mulf %20, %22 : vector<1x8xf32>
    %24 = arith.addf %23, %19 : vector<1x8xf32>
    %25 = vector.broadcast %10 : vector<32x1xi32> to vector<32x8xi32>
    %26 = vector.broadcast %6 : vector<1x8xi32> to vector<32x8xi32>
    %27 = arith.cmpi eq, %25, %26 : vector<32x8xi32>
    %c0_i32_11 = arith.constant 0 : i32
    %28 = arith.sitofp %c0_i32_11 : i32 to f32
    %29 = vector.broadcast %28 : f32 to vector<32x8xf32>
    %30 = arith.select %27, %4, %29 : vector<32x8xi1>, vector<32x8xf32>
    %cst_12 = arith.constant dense<0.000000e+00> : vector<8xf32>
    %31 = vector.multi_reduction <add>, %30, %cst_12 [0] : vector<32x8xf32> to vector<8xf32>
    %32 = vector.shape_cast %31 : vector<8xf32> to vector<1x8xf32>
    %c0_13 = arith.constant 0 : index
    %c0_14 = arith.constant 0 : index
    %33 = vector.load %arg8[%c0_13, %c0_14] : memref<1x8xf32, #tpu.memory_space<vmem>>, vector<1x8xf32>
    %34 = arith.addf %33, %32 : vector<1x8xf32>
    %c0_15 = arith.constant 0 : index
    %c0_16 = arith.constant 0 : index
    %35 = vector.load %arg6[%c0_15, %c0_16] : memref<1x8xf32, #tpu.memory_space<vmem>>, vector<1x8xf32>
    tpu.vector_store %arg6[%c0_15, %c0_16], %14 {strides = array<i32>} : memref<1x8xf32, #tpu.memory_space<vmem>>, vector<1x8xf32>,
    %c0_17 = arith.constant 0 : index
    %c0_18 = arith.constant 0 : index
    %36 = vector.load %arg7[%c0_17, %c0_18] : memref<1x8xf32, #tpu.memory_space<vmem>>, vector<1x8xf32>
    tpu.vector_store %arg7[%c0_17, %c0_18], %24 {strides = array<i32>} : memref<1x8xf32, #tpu.memory_space<vmem>>, vector<1x8xf32>,
    %c0_19 = arith.constant 0 : index
    %c0_20 = arith.constant 0 : index
    %37 = vector.load %arg8[%c0_19, %c0_20] : memref<1x8xf32, #tpu.memory_space<vmem>>, vector<1x8xf32>
    tpu.vector_store %arg8[%c0_19, %c0_20], %34 {strides = array<i32>} : memref<1x8xf32, #tpu.memory_space<vmem>>, vector<1x8xf32>,
    %c0_i32_21 = arith.constant 0 : i32
    %38 = arith.cmpi eq, %arg2, %c0_i32_21 : i32
    %39 = arith.extui %38 : i1 to i32
    %c0_i32_22 = arith.constant 0 : i32
    %40 = arith.cmpi ne, %39, %c0_i32_22 : i32
    scf.if %40 {
      %41 = math.log %24 : vector<1x8xf32>
      %42 = arith.addf %14, %41 : vector<1x8xf32>
      %43 = arith.subf %42, %34 : vector<1x8xf32>
      %c0_23 = arith.constant 0 : index
      %c0_24 = arith.constant 0 : index
      %c0_25 = arith.constant 0 : index
      %44 = vector.load %arg5[%c0_23, %c0_24, %c0_25] : memref<1x1x8xf32, #tpu.memory_space<vmem>>, vector<1x1x8xf32>
      %45 = vector.shape_cast %44 : vector<1x1x8xf32> to vector<1x8xf32>
      %46 = vector.shape_cast %43 : vector<1x8xf32> to vector<1x1x8xf32>
      tpu.vector_store %arg5[%c0_23, %c0_24, %c0_25], %46 {strides = array<i32>} : memref<1x1x8xf32, #tpu.memory_space<vmem>>, vector<1x1x8xf32>,
    } else {
    }
    return
  }
  func.func @transform_0(%arg0: i32, %arg1: i32, %arg2: i32) -> (i32, i32, i32) {
    %c0_i32 = arith.constant 0 : i32
    return %arg0, %arg2, %arg1 : i32, i32, i32
  }
  func.func @transform_1(%arg0: i32, %arg1: i32, %arg2: i32) -> (i32, i32, i32) {
    %c0_i32 = arith.constant 0 : i32
    %c0_i32_0 = arith.constant 0 : i32
    return %arg0, %c0_i32, %arg1 : i32, i32, i32
  }
  func.func @transform_2(%arg0: i32, %arg1: i32, %arg2: i32) -> (i32, i32, i32) {
    %c0_i32 = arith.constant 0 : i32
    %c0_i32_0 = arith.constant 0 : i32
    return %arg0, %c0_i32, %arg1 : i32, i32, i32
  }
}

</mosaic_0001>

<llo_original>
// kernel: tpu_custom_call.1
$region0: #{tpu_custom_call.1}
  #allocation0 [shape = 'u32[]', space=smem, size = 0x4, offset = 0x4, fixed_abs, tag = 'smem constant byte address 0x4 - core index']
  #allocation1 [shape = 'u32[144,128]{1,0:T(1,128)}', space=vmem, size = 0x12000, scoped, tag = 'internal scratch']
  #allocation2 [shape = 'f32[1,8]{1,0:T(1,128)}', space=vmem, size = 0x200, scoped, tag = 'scratch operand']
  #allocation3 [shape = 'f32[1,8]{1,0:T(1,128)}', space=vmem, size = 0x200, scoped, tag = 'scratch operand']
  #allocation4 [shape = 'f32[1,8]{1,0:T(1,128)}', space=vmem, size = 0x200, scoped, tag = 'scratch operand']
  %s0 = inlined_call_operand.vmem [shape: f32[2,32,8], index: 0, kind: input, shape index: {}]
  %s1 = inlined_call_operand.vmem [shape: s32[2,1,8], index: 1, kind: input, shape index: {}]
  %s2 = inlined_call_operand.hbm [shape: f32[2,1,8], index: 2, kind: output, shape index: {}]
  %s3 = sld [smem:[#allocation0]]
  $region49: #{tpu_custom_call.1} parent=0
    _
  %s5 = ssub.s32 1, %s3
  %s6 = scalar_select 0, %s5, %s3
  $region1: #{tpu_custom_call.1} parent=0
    #allocation5 [shape = 'u8[1024]{0}', space=vmem, size = 0x400, scoped, tag = 'output window, operand 0']
    #allocation6 [shape = 's32[2]{0}', space=sflag, size = 0x8, scoped, tag = 'scoped memory for tpu_custom_call.1']
    %7 = vsyncpa [#allocation6], 0
    %s8 = scalar_lea.sflag [#allocation6], 1
    %9 = vsyncpa %s8, 0
    loop: start=0, step=1, limit=4
    $region2: #{tpu_custom_call.1} parent=1 // loop_pre_header
      _
    $region3: #{tpu_custom_call.1} parent=1 // loop_header
      %s11 = sphi 0, %s15
      %p12 = scmp.ge.s32.totalorder %s11, 4
      %s18 = sphi 0, %s37
      %s19 = sphi 0, %s33
      %s20 = sphi 0, %s29
      %s21 = sphi 0, %s18
      %s22 = sphi 0, %s19
      %s23 = sphi 0, %s20
      %s24 = sphi 0, %s21
      %s25 = sphi 0, %s22
      %s26 = sphi 0, %s23
      %s44 = sphi 0, %s46
      %s47 = sphi 0, %s44
      %s48 = sphi 0, %s47
      %s64 = sphi 0, %s48
      %s72 = sphi 0, %s74
      %s75 = sphi 0, %s72
      %s76 = sphi 0, %s75
      %s92 = sphi 0, %s76
      %s100 = sphi 0, %s102
      %s103 = sphi 0, %s100
      %s104 = sphi 0, %s103
      %s120 = sphi 0, %s104
    $region4: #{tpu_custom_call.1} parent=1 // loop_header_branch
      %14 = sbr.rel (%p12) target = $region8
    $region5: #{tpu_custom_call.1} parent=1 // loop_body
      %s16 = ssub.s32 %s11, 1
      %s17 = ssub.s32 %s11, 2
      %s27 = sadd.s32 1, %s20
      %p28 = scmp.ge.s32.totalorder %s27, 1
      %s29 = scalar_select %p28, 0, %s27
      %s30 = sadd.s32 1, %s19
      %s31 = scalar_select %p28, %s30, %s19
      %p32 = scmp.ge.s32.totalorder %s31, 1
      %s33 = scalar_select %p32, 0, %s31
      %s34 = sadd.s32 1, %s18
      %s35 = scalar_select %p32, %s34, %s18
      %p36 = scmp.ge.s32.totalorder %s35, 2
      %s37 = scalar_select %p36, 0, %s35
      %s38 = ssub.s32 %s18, %s37
      %s39 = ssub.s32 %s20, %s29
      %s40 = sor.u32 %s38, %s39
      %s41 = ssub.s32 %s19, %s33
      %s42 = sor.u32 %s40, %s41
      %p43 = scmp.eq.s32.totalorder %s42, 0
      %s45 = sadd.s32 %s44, 1
      %s46 = scalar_select %p43, %s44, %s45
      %p49 = pneg %p43
      %p50 = scmp.eq.s32.totalorder %s11, 1
      %p51 = por %p49, %p50
      %p52 = scmp.ne.s32.totalorder %s44, %s47
      %p53 = scmp.eq.s32.totalorder %s11, 0
      %p54 = por %p52, %p53
      %p55 = scmp.ne.s32.totalorder %s44, %s47
      %p56 = scmp.eq.s32.totalorder %s16, 1
      %p57 = por %p55, %p56
      %p58 = scmp.ne.s32.totalorder %s47, %s48
      %p59 = scmp.eq.s32.totalorder %s16, 0
      %p60 = por %p58, %p59
      %p61 = scmp.ne.s32.totalorder %s47, %s48
      %p62 = scmp.eq.s32.totalorder %s17, 1
      %p63 = por %p61, %p62
      %p65 = scmp.ne.s32.totalorder %s48, %s64
      %p66 = scmp.eq.s32.totalorder %s17, 0
      %p67 = por %p65, %p66
      %s68 = ssub.s32 %s18, %s37
      %s69 = ssub.s32 %s19, %s33
      %s70 = sor.u32 %s68, %s69
      %p71 = scmp.eq.s32.totalorder %s70, 0
      %s73 = sadd.s32 %s72, 1
      %s74 = scalar_select %p71, %s72, %s73
      %p77 = pneg %p71
      %p78 = scmp.eq.s32.totalorder %s11, 1
      %p79 = por %p77, %p78
      %p80 = scmp.ne.s32.totalorder %s72, %s75
      %p81 = scmp.eq.s32.totalorder %s11, 0
      %p82 = por %p80, %p81
      %p83 = scmp.ne.s32.totalorder %s72, %s75
      %p84 = scmp.eq.s32.totalorder %s16, 1
      %p85 = por %p83, %p84
      %p86 = scmp.ne.s32.totalorder %s75, %s76
      %p87 = scmp.eq.s32.totalorder %s16, 0
      %p88 = por %p86, %p87
      %p89 = scmp.ne.s32.totalorder %s75, %s76
      %p90 = scmp.eq.s32.totalorder %s17, 1
      %p91 = por %p89, %p90
      %p93 = scmp.ne.s32.totalorder %s76, %s92
      %p94 = scmp.eq.s32.totalorder %s17, 0
      %p95 = por %p93, %p94
      %s96 = ssub.s32 %s18, %s37
      %s97 = ssub.s32 %s19, %s33
      %s98 = sor.u32 %s96, %s97
      %p99 = scmp.eq.s32.totalorder %s98, 0
      %s101 = sadd.s32 %s100, 1
      %s102 = scalar_select %p99, %s100, %s101
      %p105 = pneg %p99
      %p106 = scmp.eq.s32.totalorder %s11, 1
      %p107 = por %p105, %p106
      %p108 = scmp.ne.s32.totalorder %s100, %s103
      %p109 = scmp.eq.s32.totalorder %s11, 0
      %p110 = por %p108, %p109
      %p111 = scmp.ne.s32.totalorder %s100, %s103
      %p112 = scmp.eq.s32.totalorder %s16, 1
      %p113 = por %p111, %p112
      %p114 = scmp.ne.s32.totalorder %s103, %s104
      %p115 = scmp.eq.s32.totalorder %s16, 0
      %p116 = por %p114, %p115
      %p117 = scmp.ne.s32.totalorder %s103, %s104
      %p118 = scmp.eq.s32.totalorder %s17, 1
      %p119 = por %p117, %p118
      %p121 = scmp.ne.s32.totalorder %s104, %s120
      %p122 = scmp.eq.s32.totalorder %s17, 0
      %p123 = por %p121, %p122
      %p124 = scmp.le.s32.totalorder 1, %s11
      %p125 = scmp.lt.s32.totalorder %s11, 3
      %p126 = pnand %p124, %p125
      %p127 = pneg %p126
      // Predicated region
      $region9: #{tpu_custom_call.1} parent=5 // pred_check
        _
      $region10: #{tpu_custom_call.1} parent=5 // pred_check_branch
        %129 = sbr.rel (%p126) target = $region12
      $region11: #{tpu_custom_call.1} parent=5 // pred_region
        %s130 = ssub.s32 %s11, 1
      $region12: #{tpu_custom_call.1} parent=5 // pred_fallthru
        _
      %p131 = scmp.lt.s32.totalorder %s11, 2
      // Predicated region
      $region13: #{tpu_custom_call.1} parent=5 // pred_check
        %p132 = pneg %p131
      $region14: #{tpu_custom_call.1} parent=5 // pred_check_branch
        %134 = sbr.rel (%p132) target = $region16
      $region15: #{tpu_custom_call.1} parent=5 // pred_region
        // Predicated region
        $region17: #{tpu_custom_call.1} parent=15 // pred_check
          %p135 = pneg %p54
        $region18: #{tpu_custom_call.1} parent=15 // pred_check_branch
          %137 = sbr.rel (%p135) target = $region20
        $region19: #{tpu_custom_call.1} parent=15 // pred_region
          %s138 = smul.u32 4, %s20
          %p139 = scmp.lt.s32.totalorder %s18, 1
          %s140 = scalar_select %p139, %s18, 1
          %p141 = scmp.lt.s32.totalorder %s138, 3
          %s142 = scalar_select %p141, %s138, 3
          %p143 = scmp.lt.s32.totalorder %s19, 0
          %s144 = scalar_select %p143, %s19, 0
          %s145 = sadd.s32 %s144, %s142
          %s146 = smul.addr %s140, 4
          %s147 = sadd.s32 %s145, %s146
          %s148 = smul.addr %s147, 8
          %s149 = scalar_lea.vmem %s0, %s148
          %s150 = smul.u32 4, %s20
        $region20: #{tpu_custom_call.1} parent=15 // pred_fallthru
          _
        // Predicated region
        $region21: #{tpu_custom_call.1} parent=15 // pred_check
          %p151 = pneg %p82
        $region22: #{tpu_custom_call.1} parent=15 // pred_check_branch
          %153 = sbr.rel (%p151) target = $region24
        $region23: #{tpu_custom_call.1} parent=15 // pred_region
          %p154 = scmp.lt.s32.totalorder %s18, 1
          %s155 = scalar_select %p154, %s18, 1
          %p156 = scmp.lt.s32.totalorder %s19, 0
          %s157 = scalar_select %p156, %s19, 0
          %s158 = sadd.s32 %s157, %s155
          %s159 = scalar_lea.vmem %s1, %s158
        $region24: #{tpu_custom_call.1} parent=15 // pred_fallthru
          _
      $region16: #{tpu_custom_call.1} parent=5 // pred_fallthru
        _
      %p160 = scmp.le.s32.totalorder 1, %s11
      %p161 = scmp.lt.s32.totalorder %s11, 3
      %p162 = pnand %p160, %p161
      %p163 = pneg %p162
      // Predicated region
      $region25: #{tpu_custom_call.1} parent=5 // pred_check
        _
      $region26: #{tpu_custom_call.1} parent=5 // pred_check_branch
        %165 = sbr.rel (%p162) target = $region28
      $region27: #{tpu_custom_call.1} parent=5 // pred_region
        %s166 = ssub.s32 %s11, 1
        %s167 = smul.u32 4, %s23
        %p168 = scmp.lt.s32.totalorder %s21, 1
        %s169 = scalar_select %p168, %s21, 1
        %p170 = scmp.lt.s32.totalorder %s167, 3
        %s171 = scalar_select %p170, %s167, 3
        %p172 = scmp.lt.s32.totalorder %s22, 0
        %s173 = scalar_select %p172, %s22, 0
        %s174 = sadd.s32 %s173, %s171
        %s175 = smul.addr %s169, 4
        %s176 = sadd.s32 %s174, %s175
        %s177 = smul.addr %s176, 8
        %s178 = scalar_lea.vmem %s0, %s177
        %p179 = pneg %p60
        %p180 = pneg %p57
        %p181 = scmp.lt.s32.totalorder %s21, 1
        %s182 = scalar_select %p181, %s21, 1
        %p183 = scmp.lt.s32.totalorder %s22, 0
        %s184 = scalar_select %p183, %s22, 0
        %s185 = sadd.s32 %s184, %s182
        %s186 = scalar_lea.vmem %s1, %s185
        %p187 = pneg %p88
        %p188 = pneg %p85
        %p189 = pneg %p116
        %p190 = pneg %p113
        %s191 = sand.u32 %s103, 1
        %s192 = scalar_lea.sflag [#allocation6], %s191
        %s193 = sand.u32 %s103, 1
        %s194 = scalar_lea.vmem [#allocation5], %s193
        %s195 = smul.u32 4, %s23
        %p196 = scmp.lt.s32.totalorder %s21, 1
        %s197 = scalar_select %p196, %s21, 1
        %p198 = scmp.lt.s32.totalorder %s195, 3
        %s199 = scalar_select %p198, %s195, 3
        %p200 = scmp.lt.s32.totalorder %s22, 0
        %s201 = scalar_select %p200, %s22, 0
        %s202 = sadd.s32 %s201, %s199
        %s203 = smul.addr %s197, 4
        %s204 = sadd.s32 %s202, %s203
        %s205 = smul.addr %s204, 8
        %s206 = scalar_lea.vmem %s0, %s205
        %s207 = smul.u32 4, %s23
        %p208 = scmp.lt.s32.totalorder %s21, 1
        %s209 = scalar_select %p208, %s21, 1
        %p210 = scmp.lt.s32.totalorder %s22, 0
        %s211 = scalar_select %p210, %s22, 0
        %s212 = sadd.s32 %s211, %s209
        %s213 = scalar_lea.vmem %s1, %s212
        %p214 = scmp.eq.s32.totalorder %s23, 0
        // Predicated region
        $region29: #{tpu_custom_call.1} parent=27 // pred_check
          %p215 = pneg %p214
        $region30: #{tpu_custom_call.1} parent=27 // pred_check_branch
          %217 = sbr.rel (%p215) target = $region32
        $region31: #{tpu_custom_call.1} parent=27 // pred_region
          %vm218 = vcmask 57344
          %219 = vst.msk [vmem:[#allocation2] sm:$0x1] %vm218, -inf
          %220 = vst.msk [vmem:[#allocation3] sm:$0x1] %vm218, 0.0
          %221 = vst.msk [vmem:[#allocation4] sm:$0x1] %vm218, 0.0
        $region32: #{tpu_custom_call.1} parent=27 // pred_fallthru
          _
        %v222 = vld [vmem:[%s206] sm:$0xff]
        %v223 = vld [vmem:[%s206 + $0x8] sm:$0xff]
        %v224 = vld [vmem:[%s206 + $0x10] sm:$0xff]
        %v225 = vld [vmem:[%s206 + $0x18] sm:$0xff]
        %v226 = vld [vmem:[%s213] sm:$0x1]
        %v227 = vlaneseq
        %v228 = vshrl.u32 %v227, 7
        %v229 = vadd.s32 %v228, 8
        %v230 = vadd.s32 %v228, 16
        %v231 = vadd.s32 %v228, 24
        %s232 = smul.u32 %s23, 32
        %v233 = vstv %s232
        %v234 = vadd.s32 %v228, %v233
        %v235 = vadd.s32 %v229, %v233
        %v236 = vadd.s32 %v230, %v233
        %v237 = vadd.s32 %v231, %v233
        %vm238 = vcmask 64512
        %v239 = vsel %vm238, %v222, -inf
        %v240 = vsel %vm238, %v223, -inf
        %v241 = vsel %vm238, %v224, -inf
        %v242 = vsel %vm238, %v225, -inf
        %v243 = vmax.f32 %v239, %v240
        %v244 = vmax.f32 %v241, %v242
        %v245 = vmax.f32 %v243, %v244
        %v246 = vrot.slane %v245, 4
        %v247 = vmax.f32 %v245, %v246
        %v248 = vrot.slane %v247, 2
        %v249 = vmax.f32 %v247, %v248
        %v250 = vrot.slane %v249, 1
        %v251 = vmax.f32 %v249, %v250
        %v252 = vld [vmem:[#allocation2] sm:$0x1]
        %v253 = vmax.f32 %v252, %v251
        %v255 = vlaneseq
        %v256 = vshrl.u32 %v255, 7
        %v257 = vsub.s32 0, %v256
        %v258 = vrot.slane %v253, %v257
        %v260 = vsub.f32 %v222, %v258
        %v261 = vsub.f32 %v223, %v258
        %v262 = vsub.f32 %v224, %v258
        %v263 = vsub.f32 %v225, %v258
        %v264 = vmul.f32 %v260, 1.442695
        %v265 = vpow.pop %v264
        %v266 = vmul.f32 %v261, 1.442695
        %v267 = vpow.pop %v266
        %v268 = vmul.f32 %v262, 1.442695
        %v269 = vpow.pop %v268
        %v270 = vmul.f32 %v263, 1.442695
        %v271 = vpow.pop %v270
        %v272 = vsel %vm238, %v265, 0.0
        %v273 = vsel %vm238, %v267, 0.0
        %v274 = vadd.f32 %v272, %v273
        %v275 = vsel %vm238, %v269, 0.0
        %v276 = vadd.f32 %v274, %v275
        %v277 = vsel %vm238, %v271, 0.0
        %v278 = vadd.f32 %v276, %v277
        %v279 = vrot.slane %v278, 4
        %v280 = vadd.f32 %v278, %v279
        %v281 = vrot.slane %v280, 2
        %v282 = vadd.f32 %v280, %v281
        %v283 = vrot.slane %v282, 1
        %v284 = vadd.f32 %v282, %v283
        %v285 = vld [vmem:[#allocation3] sm:$0x1]
        %v286 = vsub.f32 %v252, %v253
        %v287 = vmul.f32 %v286, 1.442695
        %v288 = vpow.pop %v287
        %v289 = vmul.f32 %v285, %v288
        %v290 = vadd.f32 %v289, %v284
        %v291 = vlaneseq
        %v292 = vshrl.u32 %v291, 7
        %v293 = vsub.s32 0, %v292
        %v294 = vrot.slane %v226, %v293
        %vm295 = vcmp.eq.s32.totalorder %v234, %v294
        %vm296 = vcmp.eq.s32.totalorder %v235, %v294
        %vm297 = vcmp.eq.s32.totalorder %v236, %v294
        %vm298 = vcmp.eq.s32.totalorder %v237, %v294
        %v299 = vsel %vm295, %v222, 0.0
        %v300 = vsel %vm296, %v223, 0.0
        %v301 = vsel %vm297, %v224, 0.0
        %v302 = vsel %vm298, %v225, 0.0
        %v303 = vsel %vm238, %v299, 0.0
        %v304 = vsel %vm238, %v300, 0.0
        %v305 = vadd.f32 %v303, %v304
        %v306 = vsel %vm238, %v301, 0.0
        %v307 = vadd.f32 %v305, %v306
        %v308 = vsel %vm238, %v302, 0.0
        %v309 = vadd.f32 %v307, %v308
        %v310 = vrot.slane %v309, 4
        %v311 = vadd.f32 %v309, %v310
        %v312 = vrot.slane %v311, 2
        %v313 = vadd.f32 %v311, %v312
        %v314 = vrot.slane %v313, 1
        %v315 = vadd.f32 %v313, %v314
        %v316 = vld [vmem:[#allocation4] sm:$0x1]
        %v317 = vadd.f32 %v316, %v315
        %vm318 = vcmask 57344
        %319 = vst.msk [vmem:[#allocation2] sm:$0x1] %vm318, %v253
        %320 = vst.msk [vmem:[#allocation3] sm:$0x1] %vm318, %v290
        %321 = vst.msk [vmem:[#allocation4] sm:$0x1] %vm318, %v317
        // Predicated region
        $region33: #{tpu_custom_call.1} parent=27 // pred_check
          %p322 = pneg %p214
        $region34: #{tpu_custom_call.1} parent=27 // pred_check_branch
          %324 = sbr.rel (%p322) target = $region36
        $region35: #{tpu_custom_call.1} parent=27 // pred_region
          %v325 = vlog2.pop %v290
          %v326 = vmul.f32 %v325, 0.6931472
          %v327 = vadd.f32 %v253, %v326
          %v328 = vsub.f32 %v327, %v317
          %329 = vst.msk [vmem:[%s194] sm:$0x1] %vm318, %v328
        $region36: #{tpu_custom_call.1} parent=27 // pred_fallthru
          _
        %s330 = sand.u32 %s103, 1
        %s331 = scalar_lea.sflag [#allocation6], %s330
        %s332 = sand.u32 %s103, 1
        %s333 = scalar_lea.vmem [#allocation5], %s332
        // Predicated region
        $region37: #{tpu_custom_call.1} parent=27 // pred_check
          %p334 = pneg %p113
        $region38: #{tpu_custom_call.1} parent=27 // pred_check_branch
          %336 = sbr.rel (%p334) target = $region40
        $region39: #{tpu_custom_call.1} parent=27 // pred_region
          %s338 = ssub.s32 16, 16
          %339 = vsyncadd %s331, %s338
          %s340 = sadd.s32 %s22, %s21
          %s341 = smul.addr %s340, 16
          %s342 = scalar_lea.hbm %s2, %s341
          %s344 = sshll.u32 %s333, 4
          %s345 = int_to_ptr.vmem [resolvable:$true] %s344
          %347 = dma.vmem_to_hbm [thread:$0]  %s345, 16, %s342, %s331
        $region40: #{tpu_custom_call.1} parent=27 // pred_fallthru
          _
      $region28: #{tpu_custom_call.1} parent=5 // pred_fallthru
        _
      %p348 = scmp.le.s32.totalorder 2, %s11
      // Predicated region
      $region41: #{tpu_custom_call.1} parent=5 // pred_check
        %p349 = pneg %p348
      $region42: #{tpu_custom_call.1} parent=5 // pred_check_branch
        %351 = sbr.rel (%p349) target = $region44
      $region43: #{tpu_custom_call.1} parent=5 // pred_region
        %s352 = ssub.s32 %s11, 2
        // Predicated region
        $region45: #{tpu_custom_call.1} parent=43 // pred_check
          %p353 = pneg %p119
        $region46: #{tpu_custom_call.1} parent=43 // pred_check_branch
          %355 = sbr.rel (%p353) target = $region48
        $region47: #{tpu_custom_call.1} parent=43 // pred_region
          %s356 = sand.u32 %s104, 1
          %s357 = scalar_lea.sflag [#allocation6], %s356
          %s358 = sand.u32 %s104, 1
          %s359 = scalar_lea.vmem [#allocation5], %s358
          %360 = dma.done %s357, 16
        $region48: #{tpu_custom_call.1} parent=43 // pred_fallthru
          _
      $region44: #{tpu_custom_call.1} parent=5 // pred_fallthru
        _
    $region6: #{tpu_custom_call.1} parent=1 // loop_footer
      %s15 = sadd.s32 1, %s11
    $region7: #{tpu_custom_call.1} parent=1 // loop_footer_branch
      %10 = sbr.rel target = $region3
    $region8: #{tpu_custom_call.1} parent=1 // loop_exit
      _
    %361 = vsyncpa [#allocation6], 1
    %s362 = scalar_lea.sflag [#allocation6], 1
    %363 = vsyncpa %s362, 1

</llo_original>
